<compile_context>
chip_gen: v7x
topology: tpu7x:2x2x1
jax: 0.10.0
libtpu: 0.0.40
codegen_flags: <defaults>
</compile_context>

<pallas_src>
import jax
import jax.numpy as jnp
from jax.experimental import pallas as pl
from jax.experimental.pallas import tpu as pltpu


# ---------------------------------------------------------------------------
# Kernel 1: time-parallel input projection  P = x @ Wx + b   (one big GEMM)
# ---------------------------------------------------------------------------
def _proj_kernel(x_ref, wx_ref, b_ref, p_ref):
    # x_ref: (Rb, D), wx_ref: (D, H), b_ref: (1, H), p_ref: (Rb, H) f32
    p_ref[...] = (
        jnp.dot(x_ref[...], wx_ref[...], preferred_element_type=jnp.float32)
        + b_ref[...]
    )


# ---------------------------------------------------------------------------
# Kernel 2: sequential recurrence over time chunks
#   h_t = tanh(h_{t-1} @ Wh + P_t)
# ---------------------------------------------------------------------------
def _rnn_recurrence_kernel(h0_ref, wh_ref, p_ref, h_out_ref, hstate):
    # h0_ref:   (N, H)       initial hidden state (same block every chunk)
    # wh_ref:   (H, H)       recurrent weight (loop invariant, uncast)
    # p_ref:    (N, Tc, H)   precomputed input projection for this time chunk
    # h_out_ref:(N, Tc, H)   hidden-state outputs for this time chunk
    # hstate:   (N, H) f32   VMEM scratch carrying the recurrent state
    c = pl.program_id(0)

    @pl.when(c == 0)
    def _():
        hstate[...] = h0_ref[...].astype(jnp.float32)

    wh = wh_ref[...]                  # hoisted out of the unrolled time loop
    tc = p_ref.shape[1]

    h = hstate[...]
    for t in range(tc):               # small static Tc -> fully unrolled
        p_t = p_ref[:, t, :]          # (N, H), already f32
        h = jnp.tanh(
            jnp.dot(h, wh, preferred_element_type=jnp.float32) + p_t
        )
        h_out_ref[:, t, :] = h.astype(h_out_ref.dtype)

    hstate[...] = h                   # carry into the next time chunk


def _pick_time_chunk(T: int, max_chunk: int = 16) -> int:
    """Largest divisor of T that is <= max_chunk (keeps unrolling modest)."""
    for tc in range(min(T, max_chunk), 0, -1):
        if T % tc == 0:
            return tc
    return 1


def rnn_forward_pallas(x, h0, Wx, Wh, b):
    """x: (N, T, D), h0: (N, H), Wx: (D, H), Wh: (H, H), b: (H,) -> (N, T, H)."""
    N, T, D = x.shape
    H = h0.shape[1]

    # --- 1. hoisted, time-parallel input projection: one (N*T, D) x (D, H) GEMM
    R = N * T
    x2 = x.reshape(R, D)              # contiguous reshape: free, no transpose
    b2 = b.reshape(1, H)
    Rb = R if R <= 512 else 512       # row tile (demo shapes => single block)
    assert R % Rb == 0

    P2 = pl.pallas_call(
        _proj_kernel,
        out_shape=jax.ShapeDtypeStruct((R, H), jnp.float32),
        grid_spec=pltpu.PrefetchScalarGridSpec(
            num_scalar_prefetch=0,
            grid=(R // Rb,),
            in_specs=[
                pl.BlockSpec((Rb, D), lambda i: (i, 0)),   # x rows
                pl.BlockSpec((D, H), lambda i: (0, 0)),    # Wx
                pl.BlockSpec((1, H), lambda i: (0, 0)),    # b
            ],
            out_specs=pl.BlockSpec((Rb, H), lambda i: (i, 0)),
        ),
        compiler_params=pltpu.CompilerParams(
            dimension_semantics=("parallel",),
        ),
    )(x2, Wx, b2)
    P = P2.reshape(N, T, H)           # free reshape back to native layout

    # --- 2. sequential recurrence, chunked over time to amortize grid overhead
    Tc = _pick_time_chunk(T)

    hs = pl.pallas_call(
        _rnn_recurrence_kernel,
        out_shape=jax.ShapeDtypeStruct((N, T, H), x.dtype),
        grid_spec=pltpu.PrefetchScalarGridSpec(
            num_scalar_prefetch=0,
            grid=(T // Tc,),
            in_specs=[
                pl.BlockSpec((N, H), lambda c: (0, 0)),        # h0
                pl.BlockSpec((H, H), lambda c: (0, 0)),        # Wh
                pl.BlockSpec((N, Tc, H), lambda c: (0, c, 0)), # P chunk
            ],
            out_specs=pl.BlockSpec((N, Tc, H), lambda c: (0, c, 0)),
            scratch_shapes=[pltpu.VMEM((N, H), jnp.float32)],
        ),
        compiler_params=pltpu.CompilerParams(
            dimension_semantics=("arbitrary",),   # carried recurrence over time
        ),
    )(h0, Wh, P)

    return hs


class RNNPallas:
    """Mirror of the PyTorch RNN module, parameters initialized in-script."""

    def __init__(self, input_dim: int, hidden_dim: int, key):
        kx, kh = jax.random.split(key)
        self.Wx = (jax.random.normal(kx, (input_dim, hidden_dim), jnp.float32)
                   / jnp.sqrt(float(input_dim)))
        self.Wh = (jax.random.normal(kh, (hidden_dim, hidden_dim), jnp.float32)
                   / jnp.sqrt(float(hidden_dim)))
        self.b = jnp.zeros((hidden_dim,), jnp.float32)

    def forward(self, x, h0):
        return rnn_forward_pallas(x, h0, self.Wx, self.Wh, self.b)

    def step_forward(self, x, prev_h):
        # Single timestep: same kernels with T=1.
        return self.forward(x[:, None, :], prev_h)[:, 0, :]


def _rnn_reference(x, h0, Wx, Wh, b):
    def step(prev_h, x_t):
        nh = jnp.tanh(prev_h @ Wh + x_t @ Wx + b)
        return nh, nh
    _, hs = jax.lax.scan(step, h0, jnp.transpose(x, (1, 0, 2)))
    return jnp.transpose(hs, (1, 0, 2))


if __name__ == "__main__":
    key = jax.random.PRNGKey(0)
    k_param, k_x, k_h = jax.random.split(key, 3)

    N, T, D, H = 2, 8, 16, 32
    rnn = RNNPallas(D, H, k_param)

    x = jax.random.normal(k_x, (N, T, D), jnp.float32)
    h0 = jax.random.normal(k_h, (N, H), jnp.float32)

    hn = rnn.forward(x, h0)
    jax.block_until_ready(hn)

    ref = _rnn_reference(x, h0, rnn.Wx, rnn.Wh, rnn.b)
    assert hn.shape == (N, T, H)
    assert jnp.allclose(hn, ref, atol=1e-5, rtol=1e-5)

    print("KERNEL_OK")
</pallas_src>

<mosaic_0001>
module attributes {stable_mosaic.version = 11 : i64} {
  func.func @_proj_kernel(%arg0: i32, %arg1: memref<16x16xf32, #tpu.memory_space<vmem>>, %arg2: memref<16x32xf32, #tpu.memory_space<vmem>>, %arg3: memref<1x32xf32, #tpu.memory_space<vmem>>, %arg4: memref<16x32xf32, #tpu.memory_space<vmem>>) attributes {dimension_semantics = [#tpu.dimension_semantics<parallel>], iteration_bounds = array<i64: 1>, scalar_prefetch = 0 : i64, scratch_operands = 0 : i64, tpu.core_type = #tpu.core_type<tc>, window_params = [{transform_indices = @transform_0, window_bounds = array<i64: 16, 16>}, {pipeline_mode = #tpu.pipeline_mode<synchronous>, transform_indices = @transform_1, window_bounds = array<i64: 16, 32>}, {pipeline_mode = #tpu.pipeline_mode<synchronous>, transform_indices = @transform_2, window_bounds = array<i64: 1, 32>}, {transform_indices = @transform_3, window_bounds = array<i64: 16, 32>}]} {
    %c0 = arith.constant 0 : index
    %c0_0 = arith.constant 0 : index
    %0 = vector.load %arg1[%c0, %c0_0] : memref<16x16xf32, #tpu.memory_space<vmem>>, vector<16x16xf32>
    %c0_1 = arith.constant 0 : index
    %c0_2 = arith.constant 0 : index
    %1 = vector.load %arg2[%c0_1, %c0_2] : memref<16x32xf32, #tpu.memory_space<vmem>>, vector<16x32xf32>
    %cst = arith.constant dense<0.000000e+00> : vector<16x32xf32>
    %2 = tpu.matmul %0, %1, %cst {dimension_numbers = #tpu.dot_dimension_numbers<[1], [0], [0], [1], [0, 0, 1, 1], [], []>} : vector<16x16xf32>, vector<16x32xf32>, vector<16x32xf32> -> vector<16x32xf32>
    %c0_3 = arith.constant 0 : index
    %c0_4 = arith.constant 0 : index
    %3 = vector.load %arg3[%c0_3, %c0_4] : memref<1x32xf32, #tpu.memory_space<vmem>>, vector<1x32xf32>
    %4 = vector.broadcast %3 : vector<1x32xf32> to vector<16x32xf32>
    %5 = arith.addf %2, %4 : vector<16x32xf32>
    %c0_5 = arith.constant 0 : index
    %c0_6 = arith.constant 0 : index
    %6 = vector.load %arg4[%c0_5, %c0_6] : memref<16x32xf32, #tpu.memory_space<vmem>>, vector<16x32xf32>
    tpu.vector_store %arg4[%c0_5, %c0_6], %5 {strides = array<i32>} : memref<16x32xf32, #tpu.memory_space<vmem>>, vector<16x32xf32>,
    return
  }
  func.func @transform_0(%arg0: i32) -> (i32, i32) {
    %c0_i32 = arith.constant 0 : i32
    %c0_i32_0 = arith.constant 0 : i32
    return %arg0, %c0_i32 : i32, i32
  }
  func.func @transform_1(%arg0: i32) -> (i32, i32) {
    %c0_i32 = arith.constant 0 : i32
    %c0_i32_0 = arith.constant 0 : i32
    %c0_i32_1 = arith.constant 0 : i32
    return %c0_i32, %c0_i32_0 : i32, i32
  }
  func.func @transform_2(%arg0: i32) -> (i32, i32) {
    %c0_i32 = arith.constant 0 : i32
    %c0_i32_0 = arith.constant 0 : i32
    %c0_i32_1 = arith.constant 0 : i32
    return %c0_i32, %c0_i32_0 : i32, i32
  }
  func.func @transform_3(%arg0: i32) -> (i32, i32) {
    %c0_i32 = arith.constant 0 : i32
    %c0_i32_0 = arith.constant 0 : i32
    return %arg0, %c0_i32 : i32, i32
  }
}

</mosaic_0001>

<llo_original>
// kernel: tpu_custom_call.1
$region0: #{tpu_custom_call.1}
  #allocation0 [shape = 'u32[]', space=smem, size = 0x4, offset = 0x4, fixed_abs, tag = 'smem constant byte address 0x4 - core index']
  #allocation1 [shape = 'u32[144,128]{1,0:T(1,128)}', space=vmem, size = 0x12000, scoped, tag = 'internal scratch']
  %s0 = inlined_call_operand.hbm [shape: f32[16,16], index: 0, kind: input, shape index: {}]
  %s1 = inlined_call_operand.hbm [shape: f32[16,32], index: 1, kind: input, shape index: {}]
  %s2 = inlined_call_operand.vmem [shape: f32[1,32], index: 2, kind: input, shape index: {}]
  %s3 = inlined_call_operand.hbm [shape: f32[16,32], index: 3, kind: output, shape index: {}]
  %s4 = sld [smem:[#allocation0]]
  $region30: #{tpu_custom_call.1} parent=0
    _
  %s6 = ssub.s32 1, %s4
  %s7 = scalar_select 0, %s6, %s4
  $region1: #{tpu_custom_call.1} parent=0
    #allocation2 [shape = 'u8[8192]{0}', space=vmem, size = 0x2000, scoped, tag = 'input window, operand 0, single buffered']
    #allocation3 [shape = 's32[1]{0}', space=sflag, size = 0x4, scoped, tag = 'scoped memory for tpu_custom_call.1']
    #allocation4 [shape = 's32[1]{0}', space=sflag, size = 0x4, scoped, tag = 'scoped memory for tpu_custom_call.1']
    #allocation5 [shape = 'u8[8192]{0}', space=vmem, size = 0x2000, scoped, tag = 'input window, operand 1, single buffered']
    #allocation6 [shape = 's32[1]{0}', space=sflag, size = 0x4, scoped, tag = 'scoped memory for tpu_custom_call.1']
    #allocation7 [shape = 'u8[8192]{0}', space=vmem, size = 0x2000, scoped, tag = 'output window, operand 0, single buffered']
    %8 = vsyncpa [#allocation3], 0
    %9 = vsyncpa [#allocation6], 0
    %10 = vsyncpa [#allocation4], 0
    // Predicated region
    $region2: #{tpu_custom_call.1} parent=1 // pred_check
      _
    $region3: #{tpu_custom_call.1} parent=1 // pred_check_branch
      %12 = sbr.rel (0) target = $region5
    $region4: #{tpu_custom_call.1} parent=1 // pred_region
      %s14 = ssub.s32 256, 256
      %15 = vsyncadd [#allocation3], %s14
      %s16 = sshll.u32 [#allocation2], 4
      %s17 = int_to_ptr.vmem [resolvable:$true] %s16
      %22 = dma.hbm_to_vmem [thread:$0]  %s0, 256, %s17, [#allocation3], 128, 128, 8
    $region5: #{tpu_custom_call.1} parent=1 // pred_fallthru
      _
    // Predicated region
    $region6: #{tpu_custom_call.1} parent=1 // pred_check
      _
    $region7: #{tpu_custom_call.1} parent=1 // pred_check_branch
      %24 = sbr.rel (0) target = $region9
    $region8: #{tpu_custom_call.1} parent=1 // pred_region
      %s26 = ssub.s32 256, 256
      %27 = vsyncadd [#allocation6], %s26
      %s28 = sshll.u32 [#allocation5], 4
      %s29 = int_to_ptr.vmem [resolvable:$true] %s28
      %34 = dma.hbm_to_vmem [thread:$0]  %s1, 256, %s29, [#allocation6], 128, 128, 8
    $region9: #{tpu_custom_call.1} parent=1 // pred_fallthru
      _
    // Predicated region
    $region10: #{tpu_custom_call.1} parent=1 // pred_check
      _
    $region11: #{tpu_custom_call.1} parent=1 // pred_check_branch
      %36 = sbr.rel (0) target = $region13
    $region12: #{tpu_custom_call.1} parent=1 // pred_region
      _
    $region13: #{tpu_custom_call.1} parent=1 // pred_fallthru
      _
    // Predicated region
    $region14: #{tpu_custom_call.1} parent=1 // pred_check
      _
    $region15: #{tpu_custom_call.1} parent=1 // pred_check_branch
      %38 = sbr.rel (0) target = $region17
    $region16: #{tpu_custom_call.1} parent=1 // pred_region
      %39 = dma.done [#allocation3], 256
    $region17: #{tpu_custom_call.1} parent=1 // pred_fallthru
      _
    // Predicated region
    $region18: #{tpu_custom_call.1} parent=1 // pred_check
      _
    $region19: #{tpu_custom_call.1} parent=1 // pred_check_branch
      %41 = sbr.rel (0) target = $region21
    $region20: #{tpu_custom_call.1} parent=1 // pred_region
      %42 = dma.done [#allocation6], 256
    $region21: #{tpu_custom_call.1} parent=1 // pred_fallthru
      _
    %v43 = vld [vmem:[#allocation2] sm:$0xff]
    %v44 = vld [vmem:[#allocation2 + $0x8] sm:$0xff]
    %v45 = vld [vmem:[#allocation5] sm:$0xff]
    %v46 = vld [vmem:[#allocation5 + $0x8] sm:$0xff]
    %v47 = vld [vmem:[%s2] sm:$0x1]
    %v49 = vlaneseq
    %v50 = vshrl.u32 %v49, 7
    %v51 = vsub.s32 0, %v50
    %v52 = vrot.slane %v47, %v51
    %vm54 = vcmask 130048
    %v56 = vsel %vm54, %v43, 0
    %v59 = vsel %vm54, %v44, 0
    %61 = vmatprep.subr.mxu0 0.0
    %62 = vmatpush1.msra.mxu0 %v45
    %63 = vmatprep.subr.mxu0 0.0
    %64 = vmatpush1.msra.mxu0 %v46
    %65 = vmatprep.subr.mxu0 0.0
    %66 = vmatpush1.msra.mxu0 0.0
    %67 = vmatprep.subr.mxu0 0.0
    %68 = vmatpush1.msra.mxu0 0.0
    %69 = vmatprep.subr.mxu0 0.0
    %70 = vmatpush1.msra.mxu0 0.0
    %71 = vmatprep.subr.mxu0 0.0
    %72 = vmatpush1.msra.mxu0 0.0
    %73 = vmatprep.subr.mxu0 0.0
    %74 = vmatpush1.msra.mxu0 0.0
    %75 = vmatprep.subr.mxu0 0.0
    %76 = vmatpush1.msra.mxu0 0.0
    %77 = vmatprep.subr.mxu0 0.0
    %78 = vmatpush1.msra.mxu0 0.0
    %79 = vmatprep.subr.mxu0 0.0
    %80 = vmatpush1.msra.mxu0 0.0
    %81 = vmatprep.subr.mxu0 0.0
    %82 = vmatpush1.msra.mxu0 0.0
    %83 = vmatprep.subr.mxu0 0.0
    %84 = vmatpush1.msra.mxu0 0.0
    %85 = vmatprep.subr.mxu0 0.0
    %86 = vmatpush1.msra.mxu0 0.0
    %87 = vmatprep.subr.mxu0 0.0
    %88 = vmatpush1.msra.mxu0 0.0
    %89 = vmatprep.subr.mxu0 0.0
    %90 = vmatpush1.msra.mxu0 0.0
    %91 = vmatprep.subr.mxu0 0.0
    %92 = vmatpush1.msra.mxu0 0.0
    %93 = vmatprep.subr.mxu0 0.0
    %94 = vmatpush1.msra.mxu0 0.0
    %95 = vmatprep.subr.mxu0 0.0
    %96 = vmatpush1.msra.mxu0 0.0
    %97 = vmatprep.subr.mxu0 0.0
    %98 = vmatpush1.msra.mxu0 0.0
    %99 = vmatprep.subr.mxu0 0.0
    %100 = vmatpush1.msra.mxu0 0.0
    %101 = vmatprep.subr.mxu0 0.0
    %102 = vmatpush1.msra.mxu0 0.0
    %103 = vmatprep.subr.mxu0 0.0
    %104 = vmatpush1.msra.mxu0 0.0
    %105 = vmatprep.subr.mxu0 0.0
    %106 = vmatpush1.msra.mxu0 0.0
    %107 = vmatprep.subr.mxu0 0.0
    %108 = vmatpush1.msra.mxu0 0.0
    %109 = vmatprep.subr.mxu0 0.0
    %110 = vmatpush1.msra.mxu0 0.0
    %111 = vmatprep.subr.mxu0 0.0
    %112 = vmatpush1.msra.mxu0 0.0
    %113 = vmatprep.subr.mxu0 0.0
    %114 = vmatpush1.msra.mxu0 0.0
    %115 = vmatprep.subr.mxu0 0.0
    %116 = vmatpush1.msra.mxu0 0.0
    %117 = vmatprep.subr.mxu0 0.0
    %118 = vmatpush1.msra.mxu0 0.0
    %119 = vmatprep.subr.mxu0 0.0
    %120 = vmatpush1.msra.mxu0 0.0
    %121 = vmatprep.subr.mxu0 0.0
    %122 = vmatpush1.msra.mxu0 0.0
    %123 = vmatprep.subr.mxu0 0.0
    %124 = vmatpush1.msra.mxu0 0.0
    %125 = vmatprep.mubr.f32.mxu0 0.0
    %126 = vmatmul.mubr.f32.gmra.mrb[0].mxu0 %v56
    %v127 = vpop.f32.mrb[0].mxu0
    %v128 = vadd.f32 %v52, %v127
    %v129 = vpop.f32.mrb[0].mxu0
    %130 = vmatprep.mubr.f32.mxu0 0.0
    %131 = vmatmul.mubr.f32.gmra.mrb[0].mxu0 %v59
    %v132 = vpop.f32.mrb[0].mxu0
    %v133 = vadd.f32 %v52, %v132
    %v134 = vpop.f32.mrb[0].mxu0
    %135 = vdwg.mxu0
    %vm136 = vcmask 261120
    %137 = vst.msk [vmem:[#allocation7] sm:$0xff] %vm136, %v128
    %138 = vst.msk [vmem:[#allocation7 + $0x8] sm:$0xff] %vm136, %v133
    // Predicated region
    $region22: #{tpu_custom_call.1} parent=1 // pred_check
      _
    $region23: #{tpu_custom_call.1} parent=1 // pred_check_branch
      %140 = sbr.rel (0) target = $region25
    $region24: #{tpu_custom_call.1} parent=1 // pred_region
      %s142 = ssub.s32 256, 256
      %143 = vsyncadd [#allocation4], %s142
      %s144 = sshll.u32 [#allocation7], 4
      %s145 = int_to_ptr.vmem [resolvable:$true] %s144
      %150 = dma.vmem_to_hbm [thread:$0]  %s145, 256, %s3, [#allocation4], 128, 128, 8
    $region25: #{tpu_custom_call.1} parent=1 // pred_fallthru
      _
    // Predicated region
    $region26: #{tpu_custom_call.1} parent=1 // pred_check
      _
    $region27: #{tpu_custom_call.1} parent=1 // pred_check_branch
      %152 = sbr.rel (0) target = $region29
    $region28: #{tpu_custom_call.1} parent=1 // pred_region
      %153 = dma.done [#allocation4], 256
    $region29: #{tpu_custom_call.1} parent=1 // pred_fallthru
      _
    %154 = vsyncpa [#allocation3], 1
    %155 = vsyncpa [#allocation6], 1
    %156 = vsyncpa [#allocation4], 1

</llo_original>
